<compile_context>
chip_gen: v5e
topology: v5e:2x2
jax: 0.10.0
libtpu: 0.0.40
codegen_flags: <defaults>
</compile_context>

<pallas_src>
import functools

import jax
import jax.numpy as jnp
import numpy as np
from jax import lax
from jax.experimental import pallas as pl
from jax.experimental.pallas import tpu as pltpu

KSIZE = 5
PAD = 2
HALO = 8      # sublane-aligned H halo (only PAD rows of it are ever read; 8 keeps
              # the interior copy and halo zeroing unmasked full-tile stores)
EPS = 1e-5


def _basic_block_kernel(x_ref, w1_ref, wd_ref, w2_ref, g1_ref, b1_ref,
                        g2_ref, b2_ref, proj_ref, out_ref, xpad_ref, zpad_ref,
                        *, inv_cnt):
    # x_ref:    (N, H, W*Cin)        input, matmul dtype
    # w1_ref:   (5, W*Cin, W*Cout)   banded conv1 row weights (no zero columns)
    # wd_ref:   (W*Cin, W*Cout)      block-diagonal 1x1 downsample
    # w2_ref:   (5, W*Cout, W*Cout)  banded conv2 row weights
    # g*/b*:    (1, W*Cout)          BN gamma/beta, lane layout, f32
    # proj_ref: (W*Cout, W*Cout)     0/1 channel-group projector (fold @ expand)
    # out_ref:  (N*H, W*Cout)        lane-dense f32 output
    # xpad/zpad: (N, H+2*HALO, .)    VMEM scratch, H-halo padded
    N, H, WCin = x_ref.shape
    WCout = out_ref.shape[-1]
    NH = N * H
    mm = w1_ref.dtype

    proj = proj_ref[...]
    g1l, b1l = g1_ref[...], b1_ref[...]
    g2l, b2l = g2_ref[...], b2_ref[...]

    def batchnorm(y, gl, bl):
        # Per-channel batch stats without leaving the lane-dense layout:
        # (colsum @ proj) broadcasts the per-channel sum back to every W lane
        # position of that channel.  2 serialized M=1 matmuls per BN (was 4),
        # rsqrt on the EUP. Centered (biased) variance, all f32.
        colsum = jnp.sum(y, axis=0, keepdims=True)                        # (1, WCout)
        mean_l = jnp.dot(colsum, proj,
                         preferred_element_type=jnp.float32) * inv_cnt    # (1, WCout)
        d = y - mean_l
        var_l = jnp.dot(jnp.sum(d * d, axis=0, keepdims=True), proj,
                        preferred_element_type=jnp.float32) * inv_cnt
        return d * (gl * lax.rsqrt(var_l + EPS)) + bl

    # ---- H-halo-padded copy of x: all three stores are tile-aligned (HALO = 8,
    #      H multiple of 8); only the halos are zeroed. ----
    x3 = x_ref[...]                                    # (N, H, WCin)
    x0 = x3.reshape(NH, WCin)                          # layout-preserving merge
    xpad_ref[:, :HALO, :] = jnp.zeros((N, HALO, WCin), xpad_ref.dtype)
    xpad_ref[:, HALO + H:, :] = jnp.zeros((N, HALO, WCin), xpad_ref.dtype)
    xpad_ref[:, HALO:HALO + H, :] = x3

    # ---- conv1: 5 banded row matmuls (K = W*Cin, N = W*Cout); the centre tap
    #      reads x directly (no scratch round-trip, no zero downsample columns). ----
    acc1 = jnp.dot(x0, w1_ref[PAD], preferred_element_type=jnp.float32)   # (NH, WCout) f32
    for kh in range(KSIZE):
        if kh == PAD:
            continue
        xs = xpad_ref[:, HALO - PAD + kh:HALO - PAD + kh + H, :].reshape(NH, WCin)
        acc1 = acc1 + jnp.dot(xs, w1_ref[kh], preferred_element_type=jnp.float32)

    # ---- 1x1 downsample identity: one block-diagonal dot on the un-shifted input
    #      (replaces the previous all-zero extra columns carried by 5 matmuls). ----
    ident = jnp.dot(x0, wd_ref[...], preferred_element_type=jnp.float32)

    # ---- bn1 + relu (f32, lane-dense). ----
    z = jnp.maximum(batchnorm(acc1, g1l, b1l), 0.0)
    z_mm = z.astype(mm)

    # ---- conv2: same banded scheme, K = W*Cout; centre tap uses z directly. ----
    zpad_ref[:, :HALO, :] = jnp.zeros((N, HALO, WCout), zpad_ref.dtype)
    zpad_ref[:, HALO + H:, :] = jnp.zeros((N, HALO, WCout), zpad_ref.dtype)
    zpad_ref[:, HALO:HALO + H, :] = z_mm.reshape(N, H, WCout)

    acc2 = jnp.dot(z_mm, w2_ref[PAD], preferred_element_type=jnp.float32)
    for kh in range(KSIZE):
        if kh == PAD:
            continue
        zs = zpad_ref[:, HALO - PAD + kh:HALO - PAD + kh + H, :].reshape(NH, WCout)
        acc2 = acc2 + jnp.dot(zs, w2_ref[kh], preferred_element_type=jnp.float32)

    # ---- bn2 + residual + relu: lane-dense (W*Cout multiple of 128) store. ----
    out = jnp.maximum(batchnorm(acc2, g2l, b2l) + ident, 0.0)
    out_ref[...] = out.astype(out_ref.dtype)


def _banded_row_weights(w_hwio, width):
    """Fold kw taps, input channels and W zero-padding of a 5x5 conv into per-kh
    banded matrices: (KSIZE, KSIZE, Ci, Co) -> (KSIZE, width*Ci, width*Co)."""
    _, _, ci, co = w_hwio.shape
    wi = np.arange(width)[:, None]
    wo = np.arange(width)[None, :]
    kw = wi - wo + PAD                                     # tap index per (wi, wo)
    valid = ((kw >= 0) & (kw < KSIZE)).astype(np.float32)  # W zero-padding mask
    kw_idx = np.clip(kw, 0, KSIZE - 1)
    rows = []
    for kh in range(KSIZE):
        t = w_hwio[kh][kw_idx] * valid[:, :, None, None]   # (W, W, Ci, Co)
        rows.append(jnp.transpose(t, (0, 2, 1, 3)).reshape(width * ci, width * co))
    return jnp.stack(rows, axis=0)


def _block_diag_1x1(wd, width):
    """1x1 conv (Ci, Co) -> block-diagonal banded matrix (width*Ci, width*Co)."""
    ci, co = wd.shape
    eye = jnp.eye(width, dtype=wd.dtype)
    return jnp.einsum("io,cd->icod", eye, wd).reshape(width * ci, width * co)


def prepare_params(params, width, matmul_dtype=jnp.float32):
    """Build kernel-layout constants ONCE per model (not per forward): banded conv
    weights, block-diag downsample, BN group projector and lane-tiled gamma/beta.
    Matmul operands are stored in `matmul_dtype` (bf16 recommended on v6e/v7x)."""
    cout = params["w1"].shape[-1]
    return dict(
        w1b=_banded_row_weights(params["w1"], width).astype(matmul_dtype),
        w2b=_banded_row_weights(params["w2"], width).astype(matmul_dtype),
        wdb=_block_diag_1x1(params["wd"], width).astype(matmul_dtype),
        # 0/1 projector: lanes sharing a channel sum into each other (fold @ expand).
        proj=jnp.asarray(np.kron(np.ones((width, width), np.float32),
                                 np.eye(cout, dtype=np.float32))),
        g1l=jnp.tile(params["g1"].astype(jnp.float32).reshape(1, cout), (1, width)),
        b1l=jnp.tile(params["b1"].astype(jnp.float32).reshape(1, cout), (1, width)),
        g2l=jnp.tile(params["g2"].astype(jnp.float32).reshape(1, cout), (1, width)),
        b2l=jnp.tile(params["b2"].astype(jnp.float32).reshape(1, cout), (1, width)),
    )


@jax.jit
def basic_block_2d(x_nchw, prep):
    """NCHW in, NCHW out (matches the PyTorch module). `prep` = prepare_params(...),
    built once per model.  NOTE: in a multi-layer network keep activations in the
    kernel's (N, H, W*C) layout across layers; the transposes here are I/O glue."""
    n, cin, h, w = x_nchw.shape
    wcout = prep["g1l"].shape[-1]
    cout = wcout // w
    wcin = w * cin
    mm = prep["w1b"].dtype
    mmb = prep["w1b"].dtype.itemsize
    hp = h + 2 * HALO

    x = jnp.transpose(x_nchw, (0, 2, 3, 1)).reshape(n, h, wcin).astype(mm)

    # Explicit VMEM budget (defaults are 16/32 MiB scoped; v7x physical is 64 MiB).
    # Gridless single invocation -> single-buffered operands.
    need = (x.size * mmb
            + prep["w1b"].size * mmb + prep["w2b"].size * mmb + prep["wdb"].size * mmb
            + prep["proj"].size * 4 + 4 * wcout * 4
            + n * h * wcout * 4                                  # output
            + n * hp * wcin * mmb + n * hp * wcout * mmb)        # scratches
    vmem_limit = int(min(max(2 * need + (4 << 20), 16 << 20), 64 << 20))

    vmem = pl.BlockSpec(memory_space=pltpu.MemorySpace.VMEM)
    out2d = pl.pallas_call(
        functools.partial(_basic_block_kernel, inv_cnt=1.0 / float(n * h * w)),
        out_shape=jax.ShapeDtypeStruct((n * h, wcout), jnp.float32),
        in_specs=[vmem] * 9,
        out_specs=vmem,
        scratch_shapes=[pltpu.VMEM((n, hp, wcin), mm),
                        pltpu.VMEM((n, hp, wcout), mm)],
        compiler_params=pltpu.CompilerParams(vmem_limit_bytes=vmem_limit),
    )(x, prep["w1b"], prep["wdb"], prep["w2b"],
      prep["g1l"], prep["b1l"], prep["g2l"], prep["b2l"], prep["proj"])

    return jnp.transpose(out2d.reshape(n, h, w, cout), (0, 3, 1, 2))


def init_params(key, in_channel, out_channel):
    k1, k2, k3 = jax.random.split(key, 3)
    std1 = 1.0 / (in_channel * KSIZE * KSIZE) ** 0.5
    std2 = 1.0 / (out_channel * KSIZE * KSIZE) ** 0.5
    stdd = 1.0 / in_channel ** 0.5
    return dict(
        w1=jax.random.normal(k1, (KSIZE, KSIZE, in_channel, out_channel), jnp.float32) * std1,
        w2=jax.random.normal(k2, (KSIZE, KSIZE, out_channel, out_channel), jnp.float32) * std2,
        wd=jax.random.normal(k3, (in_channel, out_channel), jnp.float32) * stdd,
        g1=jnp.ones((1, out_channel), jnp.float32),
        b1=jnp.zeros((1, out_channel), jnp.float32),
        g2=jnp.ones((1, out_channel), jnp.float32),
        b2=jnp.zeros((1, out_channel), jnp.float32),
    )


def ref_forward(x_nchw, params):
    """Pure-JAX reference (training-mode BN with biased variance, HIGHEST-precision convs)."""
    x = jnp.transpose(x_nchw, (0, 2, 3, 1)).astype(jnp.float32)

    def conv(inp, w_hwio, pad):
        return lax.conv_general_dilated(
            inp, w_hwio, (1, 1), ((pad, pad), (pad, pad)),
            dimension_numbers=("NHWC", "HWIO", "NHWC"),
            precision=lax.Precision.HIGHEST)

    def bn(y, g, b):
        m = jnp.mean(y, axis=(0, 1, 2))
        v = jnp.mean((y - m) ** 2, axis=(0, 1, 2))
        return (y - m) * (g.reshape(-1) / jnp.sqrt(v + EPS)) + b.reshape(-1)

    wd_hwio = params["wd"].reshape(1, 1, *params["wd"].shape)
    ident = conv(x, wd_hwio, 0)
    out = conv(x, params["w1"], PAD)
    out = jnp.maximum(bn(out, params["g1"], params["b1"]), 0.0)
    out = conv(out, params["w2"], PAD)
    out = bn(out, params["g2"], params["b2"])
    out = jnp.maximum(out + ident, 0.0)
    return jnp.transpose(out, (0, 3, 1, 2))


if __name__ == "__main__":
    key = jax.random.PRNGKey(0)
    kx, kp = jax.random.split(key)

    N, Cin, Cout, H, W = 2, 4, 8, 16, 16          # W*Cout = 128 -> lane-dense output
    x = jax.random.normal(kx, (N, Cin, H, W), jnp.float32)
    params = init_params(kp, Cin, Cout)

    ref = jax.block_until_ready(ref_forward(x, params))

    # Primary correctness check: f32 matmul operands.
    prep32 = prepare_params(params, W, jnp.float32)          # once per model, not per call
    out = jax.block_until_ready(basic_block_2d(x, prep32))
    assert out.shape == (N, Cout, H, W), out.shape
    assert jnp.allclose(out, ref, atol=1e-2, rtol=1e-2), float(jnp.max(jnp.abs(out - ref)))

    # Fast path recommended on v6e/v7x: bf16 matmul operands (weights cached in bf16),
    # f32 accumulation, f32 BN/ReLU/output. Loose tolerance — low-precision sanity check.
    prep16 = prepare_params(params, W, jnp.bfloat16)
    out_bf16 = jax.block_until_ready(basic_block_2d(x, prep16))
    assert jnp.allclose(out_bf16, ref, atol=1e-1, rtol=1e-1), \
        float(jnp.max(jnp.abs(out_bf16 - ref)))

    print("KERNEL_OK")
</pallas_src>

<mosaic_0001>
module attributes {stable_mosaic.version = 11 : i64} {
  func.func @_basic_block_kernel(%arg0: memref<2x16x64xf32, #tpu.memory_space<vmem>>, %arg1: memref<5x64x128xf32, #tpu.memory_space<vmem>>, %arg2: memref<64x128xf32, #tpu.memory_space<vmem>>, %arg3: memref<5x128x128xf32, #tpu.memory_space<vmem>>, %arg4: memref<1x128xf32, #tpu.memory_space<vmem>>, %arg5: memref<1x128xf32, #tpu.memory_space<vmem>>, %arg6: memref<1x128xf32, #tpu.memory_space<vmem>>, %arg7: memref<1x128xf32, #tpu.memory_space<vmem>>, %arg8: memref<128x128xf32, #tpu.memory_space<vmem>>, %arg9: memref<32x128xf32, #tpu.memory_space<vmem>>, %arg10: memref<2x32x64xf32, #tpu.memory_space<vmem>>, %arg11: memref<2x32x128xf32, #tpu.memory_space<vmem>>) attributes {dimension_semantics = [], scalar_prefetch = 0 : i64, scratch_operands = 2 : i64, tpu.core_type = #tpu.core_type<tc>} {
    %c0 = arith.constant 0 : index
    %c0_0 = arith.constant 0 : index
    %0 = vector.load %arg8[%c0, %c0_0] : memref<128x128xf32, #tpu.memory_space<vmem>>, vector<128x128xf32>
    %c0_1 = arith.constant 0 : index
    %c0_2 = arith.constant 0 : index
    %1 = vector.load %arg4[%c0_1, %c0_2] : memref<1x128xf32, #tpu.memory_space<vmem>>, vector<1x128xf32>
    %c0_3 = arith.constant 0 : index
    %c0_4 = arith.constant 0 : index
    %2 = vector.load %arg5[%c0_3, %c0_4] : memref<1x128xf32, #tpu.memory_space<vmem>>, vector<1x128xf32>
    %c0_5 = arith.constant 0 : index
    %c0_6 = arith.constant 0 : index
    %3 = vector.load %arg6[%c0_5, %c0_6] : memref<1x128xf32, #tpu.memory_space<vmem>>, vector<1x128xf32>
    %c0_7 = arith.constant 0 : index
    %c0_8 = arith.constant 0 : index
    %4 = vector.load %arg7[%c0_7, %c0_8] : memref<1x128xf32, #tpu.memory_space<vmem>>, vector<1x128xf32>
    %c0_9 = arith.constant 0 : index
    %c0_10 = arith.constant 0 : index
    %c0_11 = arith.constant 0 : index
    %5 = vector.load %arg0[%c0_9, %c0_10, %c0_11] : memref<2x16x64xf32, #tpu.memory_space<vmem>>, vector<2x16x64xf32>
    %6 = vector.shape_cast %5 : vector<2x16x64xf32> to vector<32x64xf32>
    %cst = arith.constant 0.000000e+00 : f32
    %7 = vector.broadcast %cst : f32 to vector<2x8x64xf32>
    %c0_12 = arith.constant 0 : index
    %c0_13 = arith.constant 0 : index
    %c0_14 = arith.constant 0 : index
    %8 = vector.load %arg10[%c0_12, %c0_13, %c0_14] : memref<2x32x64xf32, #tpu.memory_space<vmem>>, vector<2x8x64xf32>
    tpu.vector_store %arg10[%c0_12, %c0_13, %c0_14], %7 {strides = array<i32>} : memref<2x32x64xf32, #tpu.memory_space<vmem>>, vector<2x8x64xf32>,
    %cst_15 = arith.constant 0.000000e+00 : f32
    %9 = vector.broadcast %cst_15 : f32 to vector<2x8x64xf32>
    %c0_16 = arith.constant 0 : index
    %c24 = arith.constant 24 : index
    %c0_17 = arith.constant 0 : index
    %10 = vector.load %arg10[%c0_16, %c24, %c0_17] : memref<2x32x64xf32, #tpu.memory_space<vmem>>, vector<2x8x64xf32>
    tpu.vector_store %arg10[%c0_16, %c24, %c0_17], %9 {strides = array<i32>} : memref<2x32x64xf32, #tpu.memory_space<vmem>>, vector<2x8x64xf32>,
    %c0_18 = arith.constant 0 : index
    %c8 = arith.constant 8 : index
    %c0_19 = arith.constant 0 : index
    %11 = vector.load %arg10[%c0_18, %c8, %c0_19] : memref<2x32x64xf32, #tpu.memory_space<vmem>>, vector<2x16x64xf32>
    tpu.vector_store %arg10[%c0_18, %c8, %c0_19], %5 {strides = array<i32>} : memref<2x32x64xf32, #tpu.memory_space<vmem>>, vector<2x16x64xf32>,
    %c2 = arith.constant 2 : index
    %c0_20 = arith.constant 0 : index
    %c0_21 = arith.constant 0 : index
    %12 = vector.load %arg1[%c2, %c0_20, %c0_21] : memref<5x64x128xf32, #tpu.memory_space<vmem>>, vector<1x64x128xf32>
    %13 = vector.shape_cast %12 : vector<1x64x128xf32> to vector<64x128xf32>
    %cst_22 = arith.constant dense<0.000000e+00> : vector<32x128xf32>
    %14 = tpu.matmul %6, %13, %cst_22 {dimension_numbers = #tpu.dot_dimension_numbers<[1], [0], [0], [1], [0, 0, 1, 1], [], []>} : vector<32x64xf32>, vector<64x128xf32>, vector<32x128xf32> -> vector<32x128xf32>
    %c0_23 = arith.constant 0 : index
    %c6 = arith.constant 6 : index
    %c0_24 = arith.constant 0 : index
    %15 = vector.load %arg10[%c0_23, %c6, %c0_24] : memref<2x32x64xf32, #tpu.memory_space<vmem>>, vector<2x16x64xf32>
    %16 = vector.shape_cast %15 : vector<2x16x64xf32> to vector<32x64xf32>
    %c0_25 = arith.constant 0 : index
    %c0_26 = arith.constant 0 : index
    %c0_27 = arith.constant 0 : index
    %17 = vector.load %arg1[%c0_25, %c0_26, %c0_27] : memref<5x64x128xf32, #tpu.memory_space<vmem>>, vector<1x64x128xf32>
    %18 = vector.shape_cast %17 : vector<1x64x128xf32> to vector<64x128xf32>
    %cst_28 = arith.constant dense<0.000000e+00> : vector<32x128xf32>
    %19 = tpu.matmul %16, %18, %cst_28 {dimension_numbers = #tpu.dot_dimension_numbers<[1], [0], [0], [1], [0, 0, 1, 1], [], []>} : vector<32x64xf32>, vector<64x128xf32>, vector<32x128xf32> -> vector<32x128xf32>
    %20 = arith.addf %14, %19 : vector<32x128xf32>
    %c0_29 = arith.constant 0 : index
    %c7 = arith.constant 7 : index
    %c0_30 = arith.constant 0 : index
    %21 = vector.load %arg10[%c0_29, %c7, %c0_30] : memref<2x32x64xf32, #tpu.memory_space<vmem>>, vector<2x16x64xf32>
    %22 = vector.shape_cast %21 : vector<2x16x64xf32> to vector<32x64xf32>
    %c1 = arith.constant 1 : index
    %c0_31 = arith.constant 0 : index
    %c0_32 = arith.constant 0 : index
    %23 = vector.load %arg1[%c1, %c0_31, %c0_32] : memref<5x64x128xf32, #tpu.memory_space<vmem>>, vector<1x64x128xf32>
    %24 = vector.shape_cast %23 : vector<1x64x128xf32> to vector<64x128xf32>
    %cst_33 = arith.constant dense<0.000000e+00> : vector<32x128xf32>
    %25 = tpu.matmul %22, %24, %cst_33 {dimension_numbers = #tpu.dot_dimension_numbers<[1], [0], [0], [1], [0, 0, 1, 1], [], []>} : vector<32x64xf32>, vector<64x128xf32>, vector<32x128xf32> -> vector<32x128xf32>
    %26 = arith.addf %20, %25 : vector<32x128xf32>
    %c0_34 = arith.constant 0 : index
    %c9 = arith.constant 9 : index
    %c0_35 = arith.constant 0 : index
    %27 = vector.load %arg10[%c0_34, %c9, %c0_35] : memref<2x32x64xf32, #tpu.memory_space<vmem>>, vector<2x16x64xf32>
    %28 = vector.shape_cast %27 : vector<2x16x64xf32> to vector<32x64xf32>
    %c3 = arith.constant 3 : index
    %c0_36 = arith.constant 0 : index
    %c0_37 = arith.constant 0 : index
    %29 = vector.load %arg1[%c3, %c0_36, %c0_37] : memref<5x64x128xf32, #tpu.memory_space<vmem>>, vector<1x64x128xf32>
    %30 = vector.shape_cast %29 : vector<1x64x128xf32> to vector<64x128xf32>
    %cst_38 = arith.constant dense<0.000000e+00> : vector<32x128xf32>
    %31 = tpu.matmul %28, %30, %cst_38 {dimension_numbers = #tpu.dot_dimension_numbers<[1], [0], [0], [1], [0, 0, 1, 1], [], []>} : vector<32x64xf32>, vector<64x128xf32>, vector<32x128xf32> -> vector<32x128xf32>
    %32 = arith.addf %26, %31 : vector<32x128xf32>
    %c0_39 = arith.constant 0 : index
    %c10 = arith.constant 10 : index
    %c0_40 = arith.constant 0 : index
    %33 = vector.load %arg10[%c0_39, %c10, %c0_40] : memref<2x32x64xf32, #tpu.memory_space<vmem>>, vector<2x16x64xf32>
    %34 = vector.shape_cast %33 : vector<2x16x64xf32> to vector<32x64xf32>
    %c4 = arith.constant 4 : index
    %c0_41 = arith.constant 0 : index
    %c0_42 = arith.constant 0 : index
    %35 = vector.load %arg1[%c4, %c0_41, %c0_42] : memref<5x64x128xf32, #tpu.memory_space<vmem>>, vector<1x64x128xf32>
    %36 = vector.shape_cast %35 : vector<1x64x128xf32> to vector<64x128xf32>
    %cst_43 = arith.constant dense<0.000000e+00> : vector<32x128xf32>
    %37 = tpu.matmul %34, %36, %cst_43 {dimension_numbers = #tpu.dot_dimension_numbers<[1], [0], [0], [1], [0, 0, 1, 1], [], []>} : vector<32x64xf32>, vector<64x128xf32>, vector<32x128xf32> -> vector<32x128xf32>
    %38 = arith.addf %32, %37 : vector<32x128xf32>
    %c0_44 = arith.constant 0 : index
    %c0_45 = arith.constant 0 : index
    %39 = vector.load %arg2[%c0_44, %c0_45] : memref<64x128xf32, #tpu.memory_space<vmem>>, vector<64x128xf32>
    %cst_46 = arith.constant dense<0.000000e+00> : vector<32x128xf32>
    %40 = tpu.matmul %6, %39, %cst_46 {dimension_numbers = #tpu.dot_dimension_numbers<[1], [0], [0], [1], [0, 0, 1, 1], [], []>} : vector<32x64xf32>, vector<64x128xf32>, vector<32x128xf32> -> vector<32x128xf32>
    %cst_47 = arith.constant dense<0.000000e+00> : vector<128xf32>
    %41 = vector.multi_reduction <add>, %38, %cst_47 [0] : vector<32x128xf32> to vector<128xf32>
    %42 = vector.shape_cast %41 : vector<128xf32> to vector<1x128xf32>
    %cst_48 = arith.constant dense<0.000000e+00> : vector<1x128xf32>
    %43 = tpu.matmul %42, %0, %cst_48 {dimension_numbers = #tpu.dot_dimension_numbers<[1], [0], [0], [1], [0, 0, 1, 1], [], []>} : vector<1x128xf32>, vector<128x128xf32>, vector<1x128xf32> -> vector<1x128xf32>
    %cst_49 = arith.constant 0.001953125 : f32
    %44 = vector.broadcast %cst_49 : f32 to vector<1x128xf32>
    %45 = arith.mulf %43, %44 : vector<1x128xf32>
    %46 = vector.broadcast %45 : vector<1x128xf32> to vector<32x128xf32>
    %47 = arith.subf %38, %46 : vector<32x128xf32>
    %48 = arith.mulf %47, %47 : vector<32x128xf32>
    %cst_50 = arith.constant dense<0.000000e+00> : vector<128xf32>
    %49 = vector.multi_reduction <add>, %48, %cst_50 [0] : vector<32x128xf32> to vector<128xf32>
    %50 = vector.shape_cast %49 : vector<128xf32> to vector<1x128xf32>
    %cst_51 = arith.constant dense<0.000000e+00> : vector<1x128xf32>
    %51 = tpu.matmul %50, %0, %cst_51 {dimension_numbers = #tpu.dot_dimension_numbers<[1], [0], [0], [1], [0, 0, 1, 1], [], []>} : vector<1x128xf32>, vector<128x128xf32>, vector<1x128xf32> -> vector<1x128xf32>
    %cst_52 = arith.constant 0.001953125 : f32
    %52 = vector.broadcast %cst_52 : f32 to vector<1x128xf32>
    %53 = arith.mulf %51, %52 : vector<1x128xf32>
    %cst_53 = arith.constant 9.99999974E-6 : f32
    %54 = vector.broadcast %cst_53 : f32 to vector<1x128xf32>
    %55 = arith.addf %53, %54 : vector<1x128xf32>
    %56 = math.rsqrt %55 : vector<1x128xf32>
    %57 = arith.mulf %1, %56 : vector<1x128xf32>
    %58 = vector.broadcast %57 : vector<1x128xf32> to vector<32x128xf32>
    %59 = arith.mulf %47, %58 : vector<32x128xf32>
    %60 = vector.broadcast %2 : vector<1x128xf32> to vector<32x128xf32>
    %61 = arith.addf %59, %60 : vector<32x128xf32>
    %cst_54 = arith.constant 0.000000e+00 : f32
    %62 = vector.broadcast %cst_54 : f32 to vector<32x128xf32>
    %63 = arith.maximumf %61, %62 : vector<32x128xf32>
    %cst_55 = arith.constant 0.000000e+00 : f32
    %64 = vector.broadcast %cst_55 : f32 to vector<2x8x128xf32>
    %c0_56 = arith.constant 0 : index
    %c0_57 = arith.constant 0 : index
    %c0_58 = arith.constant 0 : index
    %65 = vector.load %arg11[%c0_56, %c0_57, %c0_58] : memref<2x32x128xf32, #tpu.memory_space<vmem>>, vector<2x8x128xf32>
    tpu.vector_store %arg11[%c0_56, %c0_57, %c0_58], %64 {strides = array<i32>} : memref<2x32x128xf32, #tpu.memory_space<vmem>>, vector<2x8x128xf32>,
    %cst_59 = arith.constant 0.000000e+00 : f32
    %66 = vector.broadcast %cst_59 : f32 to vector<2x8x128xf32>
    %c0_60 = arith.constant 0 : index
    %c24_61 = arith.constant 24 : index
    %c0_62 = arith.constant 0 : index
    %67 = vector.load %arg11[%c0_60, %c24_61, %c0_62] : memref<2x32x128xf32, #tpu.memory_space<vmem>>, vector<2x8x128xf32>
    tpu.vector_store %arg11[%c0_60, %c24_61, %c0_62], %66 {strides = array<i32>} : memref<2x32x128xf32, #tpu.memory_space<vmem>>, vector<2x8x128xf32>,
    %68 = vector.shape_cast %63 : vector<32x128xf32> to vector<2x16x128xf32>
    %c0_63 = arith.constant 0 : index
    %c8_64 = arith.constant 8 : index
    %c0_65 = arith.constant 0 : index
    %69 = vector.load %arg11[%c0_63, %c8_64, %c0_65] : memref<2x32x128xf32, #tpu.memory_space<vmem>>, vector<2x16x128xf32>
    tpu.vector_store %arg11[%c0_63, %c8_64, %c0_65], %68 {strides = array<i32>} : memref<2x32x128xf32, #tpu.memory_space<vmem>>, vector<2x16x128xf32>,
    %c2_66 = arith.constant 2 : index
    %c0_67 = arith.constant 0 : index
    %c0_68 = arith.constant 0 : index
    %70 = vector.load %arg3[%c2_66, %c0_67, %c0_68] : memref<5x128x128xf32, #tpu.memory_space<vmem>>, vector<1x128x128xf32>
    %71 = vector.shape_cast %70 : vector<1x128x128xf32> to vector<128x128xf32>
    %cst_69 = arith.constant dense<0.000000e+00> : vector<32x128xf32>
    %72 = tpu.matmul %63, %71, %cst_69 {dimension_numbers = #tpu.dot_dimension_numbers<[1], [0], [0], [1], [0, 0, 1, 1], [], []>} : vector<32x128xf32>, vector<128x128xf32>, vector<32x128xf32> -> vector<32x128xf32>
    %c0_70 = arith.constant 0 : index
    %c6_71 = arith.constant 6 : index
    %c0_72 = arith.constant 0 : index
    %73 = vector.load %arg11[%c0_70, %c6_71, %c0_72] : memref<2x32x128xf32, #tpu.memory_space<vmem>>, vector<2x16x128xf32>
    %74 = vector.shape_cast %73 : vector<2x16x128xf32> to vector<32x128xf32>
    %c0_73 = arith.constant 0 : index
    %c0_74 = arith.constant 0 : index
    %c0_75 = arith.constant 0 : index
    %75 = vector.load %arg3[%c0_73, %c0_74, %c0_75] : memref<5x128x128xf32, #tpu.memory_space<vmem>>, vector<1x128x128xf32>
    %76 = vector.shape_cast %75 : vector<1x128x128xf32> to vector<128x128xf32>
    %cst_76 = arith.constant dense<0.000000e+00> : vector<32x128xf32>
    %77 = tpu.matmul %74, %76, %cst_76 {dimension_numbers = #tpu.dot_dimension_numbers<[1], [0], [0], [1], [0, 0, 1, 1], [], []>} : vector<32x128xf32>, vector<128x128xf32>, vector<32x128xf32> -> vector<32x128xf32>
    %78 = arith.addf %72, %77 : vector<32x128xf32>
    %c0_77 = arith.constant 0 : index
    %c7_78 = arith.constant 7 : index
    %c0_79 = arith.constant 0 : index
    %79 = vector.load %arg11[%c0_77, %c7_78, %c0_79] : memref<2x32x128xf32, #tpu.memory_space<vmem>>, vector<2x16x128xf32>
    %80 = vector.shape_cast %79 : vector<2x16x128xf32> to vector<32x128xf32>
    %c1_80 = arith.constant 1 : index
    %c0_81 = arith.constant 0 : index
    %c0_82 = arith.constant 0 : index
    %81 = vector.load %arg3[%c1_80, %c0_81, %c0_82] : memref<5x128x128xf32, #tpu.memory_space<vmem>>, vector<1x128x128xf32>
    %82 = vector.shape_cast %81 : vector<1x128x128xf32> to vector<128x128xf32>
    %cst_83 = arith.constant dense<0.000000e+00> : vector<32x128xf32>
    %83 = tpu.matmul %80, %82, %cst_83 {dimension_numbers = #tpu.dot_dimension_numbers<[1], [0], [0], [1], [0, 0, 1, 1], [], []>} : vector<32x128xf32>, vector<128x128xf32>, vector<32x128xf32> -> vector<32x128xf32>
    %84 = arith.addf %78, %83 : vector<32x128xf32>
    %c0_84 = arith.constant 0 : index
    %c9_85 = arith.constant 9 : index
    %c0_86 = arith.constant 0 : index
    %85 = vector.load %arg11[%c0_84, %c9_85, %c0_86] : memref<2x32x128xf32, #tpu.memory_space<vmem>>, vector<2x16x128xf32>
    %86 = vector.shape_cast %85 : vector<2x16x128xf32> to vector<32x128xf32>
    %c3_87 = arith.constant 3 : index
    %c0_88 = arith.constant 0 : index
    %c0_89 = arith.constant 0 : index
    %87 = vector.load %arg3[%c3_87, %c0_88, %c0_89] : memref<5x128x128xf32, #tpu.memory_space<vmem>>, vector<1x128x128xf32>
    %88 = vector.shape_cast %87 : vector<1x128x128xf32> to vector<128x128xf32>
    %cst_90 = arith.constant dense<0.000000e+00> : vector<32x128xf32>
    %89 = tpu.matmul %86, %88, %cst_90 {dimension_numbers = #tpu.dot_dimension_numbers<[1], [0], [0], [1], [0, 0, 1, 1], [], []>} : vector<32x128xf32>, vector<128x128xf32>, vector<32x128xf32> -> vector<32x128xf32>
    %90 = arith.addf %84, %89 : vector<32x128xf32>
    %c0_91 = arith.constant 0 : index
    %c10_92 = arith.constant 10 : index
    %c0_93 = arith.constant 0 : index
    %91 = vector.load %arg11[%c0_91, %c10_92, %c0_93] : memref<2x32x128xf32, #tpu.memory_space<vmem>>, vector<2x16x128xf32>
    %92 = vector.shape_cast %91 : vector<2x16x128xf32> to vector<32x128xf32>
    %c4_94 = arith.constant 4 : index
    %c0_95 = arith.constant 0 : index
    %c0_96 = arith.constant 0 : index
    %93 = vector.load %arg3[%c4_94, %c0_95, %c0_96] : memref<5x128x128xf32, #tpu.memory_space<vmem>>, vector<1x128x128xf32>
    %94 = vector.shape_cast %93 : vector<1x128x128xf32> to vector<128x128xf32>
    %cst_97 = arith.constant dense<0.000000e+00> : vector<32x128xf32>
    %95 = tpu.matmul %92, %94, %cst_97 {dimension_numbers = #tpu.dot_dimension_numbers<[1], [0], [0], [1], [0, 0, 1, 1], [], []>} : vector<32x128xf32>, vector<128x128xf32>, vector<32x128xf32> -> vector<32x128xf32>
    %96 = arith.addf %90, %95 : vector<32x128xf32>
    %cst_98 = arith.constant dense<0.000000e+00> : vector<128xf32>
    %97 = vector.multi_reduction <add>, %96, %cst_98 [0] : vector<32x128xf32> to vector<128xf32>
    %98 = vector.shape_cast %97 : vector<128xf32> to vector<1x128xf32>
    %cst_99 = arith.constant dense<0.000000e+00> : vector<1x128xf32>
    %99 = tpu.matmul %98, %0, %cst_99 {dimension_numbers = #tpu.dot_dimension_numbers<[1], [0], [0], [1], [0, 0, 1, 1], [], []>} : vector<1x128xf32>, vector<128x128xf32>, vector<1x128xf32> -> vector<1x128xf32>
    %cst_100 = arith.constant 0.001953125 : f32
    %100 = vector.broadcast %cst_100 : f32 to vector<1x128xf32>
    %101 = arith.mulf %99, %100 : vector<1x128xf32>
    %102 = vector.broadcast %101 : vector<1x128xf32> to vector<32x128xf32>
    %103 = arith.subf %96, %102 : vector<32x128xf32>
    %104 = arith.mulf %103, %103 : vector<32x128xf32>
    %cst_101 = arith.constant dense<0.000000e+00> : vector<128xf32>
    %105 = vector.multi_reduction <add>, %104, %cst_101 [0] : vector<32x128xf32> to vector<128xf32>
    %106 = vector.shape_cast %105 : vector<128xf32> to vector<1x128xf32>
    %cst_102 = arith.constant dense<0.000000e+00> : vector<1x128xf32>
    %107 = tpu.matmul %106, %0, %cst_102 {dimension_numbers = #tpu.dot_dimension_numbers<[1], [0], [0], [1], [0, 0, 1, 1], [], []>} : vector<1x128xf32>, vector<128x128xf32>, vector<1x128xf32> -> vector<1x128xf32>
    %cst_103 = arith.constant 0.001953125 : f32
    %108 = vector.broadcast %cst_103 : f32 to vector<1x128xf32>
    %109 = arith.mulf %107, %108 : vector<1x128xf32>
    %cst_104 = arith.constant 9.99999974E-6 : f32
    %110 = vector.broadcast %cst_104 : f32 to vector<1x128xf32>
    %111 = arith.addf %109, %110 : vector<1x128xf32>
    %112 = math.rsqrt %111 : vector<1x128xf32>
    %113 = arith.mulf %3, %112 : vector<1x128xf32>
    %114 = vector.broadcast %113 : vector<1x128xf32> to vector<32x128xf32>
    %115 = arith.mulf %103, %114 : vector<32x128xf32>
    %116 = vector.broadcast %4 : vector<1x128xf32> to vector<32x128xf32>
    %117 = arith.addf %115, %116 : vector<32x128xf32>
    %118 = arith.addf %117, %40 : vector<32x128xf32>
    %cst_105 = arith.constant 0.000000e+00 : f32
    %119 = vector.broadcast %cst_105 : f32 to vector<32x128xf32>
    %120 = arith.maximumf %118, %119 : vector<32x128xf32>
    %c0_106 = arith.constant 0 : index
    %c0_107 = arith.constant 0 : index
    %121 = vector.load %arg9[%c0_106, %c0_107] : memref<32x128xf32, #tpu.memory_space<vmem>>, vector<32x128xf32>
    tpu.vector_store %arg9[%c0_106, %c0_107], %120 {strides = array<i32>} : memref<32x128xf32, #tpu.memory_space<vmem>>, vector<32x128xf32>,
    return
  }
}

</mosaic_0001>

<llo_original>
// kernel: basic_block_2d.1
$region0: #{basic_block_2d.1}
  #allocation0 [shape = 'u32[]', space=smem, size = 0x4, offset = 0x4, fixed_abs, tag = 'smem constant byte address 0x4 - core index']
  #allocation1 [shape = 'u32[72,128]{1,0:T(1,128)}', space=vmem, size = 0x9000, scoped, tag = 'internal scratch']
  #allocation2 [shape = 'f32[2,32,64]{2,1,0:T(8,128)}', space=vmem, size = 0x8000, scoped, tag = 'scratch operand']
  #allocation3 [shape = 'f32[2,32,128]{2,1,0:T(8,128)}', space=vmem, size = 0x8000, scoped, tag = 'scratch operand']
  %s0 = inlined_call_operand.vmem [shape: f32[2,16,64], index: 0, kind: input, shape index: {}]
  %s1 = inlined_call_operand.vmem [shape: f32[5,64,128], index: 1, kind: input, shape index: {}]
  %s2 = inlined_call_operand.vmem [shape: f32[64,128], index: 2, kind: input, shape index: {}]
  %s3 = inlined_call_operand.hbm [shape: f32[5,128,128], index: 3, kind: input, shape index: {}]
  %s4 = inlined_call_operand.vmem [shape: f32[1,128], index: 4, kind: input, shape index: {}]
  %s5 = inlined_call_operand.vmem [shape: f32[1,128], index: 5, kind: input, shape index: {}]
  %s6 = inlined_call_operand.vmem [shape: f32[1,128], index: 6, kind: input, shape index: {}]
  %s7 = inlined_call_operand.vmem [shape: f32[1,128], index: 7, kind: input, shape index: {}]
  %s8 = inlined_call_operand.hbm [shape: f32[128,128], index: 8, kind: input, shape index: {}]
  %s9 = inlined_call_operand.vmem [shape: f32[32,128], index: 9, kind: output, shape index: {}]
  %s10 = sld [smem:[#allocation0]]
  $region54: #{basic_block_2d.1} parent=0
    _
  %s12 = ssub.s32 1, %s10
  %s13 = scalar_select 0, %s12, %s10
  $region1: #{basic_block_2d.1} parent=0
    #allocation4 [shape = 'u8[327680]{0}', space=vmem, size = 0x50000, scoped, tag = 'input window, operand 3, single buffered']
    #allocation5 [shape = 's32[1]{0}', space=sflag, size = 0x4, scoped, tag = 'scoped memory for basic_block_2d.1']
    #allocation6 [shape = 'u8[65536]{0}', space=vmem, size = 0x10000, scoped, tag = 'input window, operand 8, single buffered']
    #allocation7 [shape = 's32[1]{0}', space=sflag, size = 0x4, scoped, tag = 'scoped memory for basic_block_2d.1']
    %14 = vsyncpa [#allocation5], 0
    %15 = vsyncpa [#allocation7], 0
    // Predicated region
    $region2: #{basic_block_2d.1} parent=1 // pred_check
      _
    $region3: #{basic_block_2d.1} parent=1 // pred_check_branch
      %17 = sbr.rel (0) target = $region5
    $region4: #{basic_block_2d.1} parent=1 // pred_region
      _
    $region5: #{basic_block_2d.1} parent=1 // pred_fallthru
      _
    // Predicated region
    $region6: #{basic_block_2d.1} parent=1 // pred_check
      _
    $region7: #{basic_block_2d.1} parent=1 // pred_check_branch
      %19 = sbr.rel (0) target = $region9
    $region8: #{basic_block_2d.1} parent=1 // pred_region
      _
    $region9: #{basic_block_2d.1} parent=1 // pred_fallthru
      _
    // Predicated region
    $region10: #{basic_block_2d.1} parent=1 // pred_check
      _
    $region11: #{basic_block_2d.1} parent=1 // pred_check_branch
      %21 = sbr.rel (0) target = $region13
    $region12: #{basic_block_2d.1} parent=1 // pred_region
      _
    $region13: #{basic_block_2d.1} parent=1 // pred_fallthru
      _
    // Predicated region
    $region14: #{basic_block_2d.1} parent=1 // pred_check
      _
    $region15: #{basic_block_2d.1} parent=1 // pred_check_branch
      %23 = sbr.rel (0) target = $region17
    $region16: #{basic_block_2d.1} parent=1 // pred_region
      %25 = vsyncadd [#allocation5], 0
      %s26 = sshll.u32 %s3, 4
      %s27 = int_to_ptr.hbm [resolvable:$true] %s26
      %s28 = sshll.u32 [#allocation4], 4
      %s29 = int_to_ptr.vmem [resolvable:$true] %s28
      %34 = dma.hbm_to_vmem [thread:$0]  %s27, 10240, %s29, [#allocation5], 128, 128, 8
    $region17: #{basic_block_2d.1} parent=1 // pred_fallthru
      _
    // Predicated region
    $region18: #{basic_block_2d.1} parent=1 // pred_check
      _
    $region19: #{basic_block_2d.1} parent=1 // pred_check_branch
      %36 = sbr.rel (0) target = $region21
    $region20: #{basic_block_2d.1} parent=1 // pred_region
      _
    $region21: #{basic_block_2d.1} parent=1 // pred_fallthru
      _
    // Predicated region
    $region22: #{basic_block_2d.1} parent=1 // pred_check
      _
    $region23: #{basic_block_2d.1} parent=1 // pred_check_branch
      %38 = sbr.rel (0) target = $region25
    $region24: #{basic_block_2d.1} parent=1 // pred_region
      _
    $region25: #{basic_block_2d.1} parent=1 // pred_fallthru
      _
    // Predicated region
    $region26: #{basic_block_2d.1} parent=1 // pred_check
      _
    $region27: #{basic_block_2d.1} parent=1 // pred_check_branch
      %40 = sbr.rel (0) target = $region29
    $region28: #{basic_block_2d.1} parent=1 // pred_region
      _
    $region29: #{basic_block_2d.1} parent=1 // pred_fallthru
      _
    // Predicated region
    $region30: #{basic_block_2d.1} parent=1 // pred_check
      _
    $region31: #{basic_block_2d.1} parent=1 // pred_check_branch
      %42 = sbr.rel (0) target = $region33
    $region32: #{basic_block_2d.1} parent=1 // pred_region
      _
    $region33: #{basic_block_2d.1} parent=1 // pred_fallthru
      _
    // Predicated region
    $region34: #{basic_block_2d.1} parent=1 // pred_check
      _
    $region35: #{basic_block_2d.1} parent=1 // pred_check_branch
      %44 = sbr.rel (0) target = $region37
    $region36: #{basic_block_2d.1} parent=1 // pred_region
      %46 = vsyncadd [#allocation7], 0
      %s47 = sshll.u32 %s8, 4
      %s48 = int_to_ptr.hbm [resolvable:$true] %s47
      %s49 = sshll.u32 [#allocation6], 4
      %s50 = int_to_ptr.vmem [resolvable:$true] %s49
      %55 = dma.hbm_to_vmem [thread:$0]  %s48, 2048, %s50, [#allocation7], 128, 128, 8
    $region37: #{basic_block_2d.1} parent=1 // pred_fallthru
      _
    // Predicated region
    $region38: #{basic_block_2d.1} parent=1 // pred_check
      _
    $region39: #{basic_block_2d.1} parent=1 // pred_check_branch
      %57 = sbr.rel (0) target = $region41
    $region40: #{basic_block_2d.1} parent=1 // pred_region
      %59 = dma.done [#allocation5], 10240
    $region41: #{basic_block_2d.1} parent=1 // pred_fallthru
      _
    // Predicated region
    $region42: #{basic_block_2d.1} parent=1 // pred_check
      _
    $region43: #{basic_block_2d.1} parent=1 // pred_check_branch
      %61 = sbr.rel (0) target = $region45
    $region44: #{basic_block_2d.1} parent=1 // pred_region
      %63 = dma.done [#allocation7], 2048
    $region45: #{basic_block_2d.1} parent=1 // pred_fallthru
      _
    %v64 = vld [vmem:[#allocation6] sm:$0xff]
    %v65 = vld [vmem:[#allocation6 + $0x8] sm:$0xff]
    %v66 = vld [vmem:[#allocation6 + $0x10] sm:$0xff]
    %v67 = vld [vmem:[#allocation6 + $0x18] sm:$0xff]
    %v68 = vld [vmem:[#allocation6 + $0x20] sm:$0xff]
    %v69 = vld [vmem:[#allocation6 + $0x28] sm:$0xff]
    %v70 = vld [vmem:[#allocation6 + $0x30] sm:$0xff]
    %v71 = vld [vmem:[#allocation6 + $0x38] sm:$0xff]
    %v72 = vld [vmem:[#allocation6 + $0x40] sm:$0xff]
    %v73 = vld [vmem:[#allocation6 + $0x48] sm:$0xff]
    %v74 = vld [vmem:[#allocation6 + $0x50] sm:$0xff]
    %v75 = vld [vmem:[#allocation6 + $0x58] sm:$0xff]
    %v76 = vld [vmem:[#allocation6 + $0x60] sm:$0xff]
    %v77 = vld [vmem:[#allocation6 + $0x68] sm:$0xff]
    %v78 = vld [vmem:[#allocation6 + $0x70] sm:$0xff]
    %v79 = vld [vmem:[#allocation6 + $0x78] sm:$0xff]
    %v80 = vld [vmem:[%s4] sm:$0x1]
    %v81 = vld [vmem:[%s5] sm:$0x1]
    %v82 = vld [vmem:[%s6] sm:$0x1]
    %v83 = vld [vmem:[%s7] sm:$0x1]
    %v84 = vld [vmem:[%s0] sm:$0xff]
    %v85 = vld [vmem:[%s0 + $0x8] sm:$0xff]
    %v86 = vld [vmem:[%s0 + $0x10] sm:$0xff]
    %v87 = vld [vmem:[%s0 + $0x18] sm:$0xff]
    %vm88 = vcmask 523264
    %89 = vst.msk [vmem:[#allocation2] sm:$0xff] %vm88, 0.0
    %90 = vst.msk [vmem:[#allocation2 + $0x20] sm:$0xff] %vm88, 0.0
    %91 = vst.msk [vmem:[#allocation2 + $0x18] sm:$0xff] %vm88, 0.0
    %92 = vst.msk [vmem:[#allocation2 + $0x38] sm:$0xff] %vm88, 0.0
    %93 = vst.msk [vmem:[#allocation2 + $0x8] sm:$0xff] %vm88, %v84
    %94 = vst.msk [vmem:[#allocation2 + $0x10] sm:$0xff] %vm88, %v85
    %95 = vst.msk [vmem:[#allocation2 + $0x28] sm:$0xff] %vm88, %v86
    %96 = vst.msk [vmem:[#allocation2 + $0x30] sm:$0xff] %vm88, %v87
    %s97 = scalar_lea.vmem %s1, 128
    %v98 = vld [vmem:[%s97] sm:$0xff]
    %v99 = vld [vmem:[%s97 + $0x8] sm:$0xff]
    %v100 = vld [vmem:[%s97 + $0x10] sm:$0xff]
    %v101 = vld [vmem:[%s97 + $0x18] sm:$0xff]
    %v102 = vld [vmem:[%s97 + $0x20] sm:$0xff]
    %v103 = vld [vmem:[%s97 + $0x28] sm:$0xff]
    %v104 = vld [vmem:[%s97 + $0x30] sm:$0xff]
    %v105 = vld [vmem:[%s97 + $0x38] sm:$0xff]
    %v106 = vld [vmem:[#allocation2 + $0x6] sm:$0xff]
    %v107 = vld [vmem:[#allocation2 + $0xe] sm:$0xff]
    %v108 = vld [vmem:[#allocation2 + $0x26] sm:$0xff]
    %v109 = vld [vmem:[#allocation2 + $0x2e] sm:$0xff]
    %v110 = vld [vmem:[%s1] sm:$0xff]
    %v111 = vld [vmem:[%s1 + $0x8] sm:$0xff]
    %v112 = vld [vmem:[%s1 + $0x10] sm:$0xff]
    %v113 = vld [vmem:[%s1 + $0x18] sm:$0xff]
    %v114 = vld [vmem:[%s1 + $0x20] sm:$0xff]
    %v115 = vld [vmem:[%s1 + $0x28] sm:$0xff]
    %v116 = vld [vmem:[%s1 + $0x30] sm:$0xff]
    %v117 = vld [vmem:[%s1 + $0x38] sm:$0xff]
    %v119 = vsel %vm88, %v106, 0
    %v122 = vsel %vm88, %v107, 0
    %v125 = vsel %vm88, %v108, 0
    %v128 = vsel %vm88, %v109, 0
    %130 = vmatpush.msra.mxu0 0.0
    %131 = vmatpush.msra.mxu0 0.0
    %132 = vmatpush.msra.mxu0 0.0
    %133 = vmatpush.msra.mxu0 0.0
    %134 = vmatpush.msra.mxu0 0.0
    %135 = vmatpush.msra.mxu0 0.0
    %136 = vmatpush.msra.mxu0 0.0
    %137 = vmatpush.msra.mxu0 0.0
    %138 = vmatpush.msra.mxu0 %v117
    %139 = vmatpush.msra.mxu0 %v116
    %140 = vmatpush.msra.mxu0 %v115
    %141 = vmatpush.msra.mxu0 %v114
    %142 = vmatpush.msra.mxu0 %v113
    %143 = vmatpush.msra.mxu0 %v112
    %144 = vmatpush.msra.mxu0 %v111
    %145 = vmatpush.msra.mxu0 %v110
    %146 = vmatmul.f32.gmra.mxu0 %v119
    %v147 = vpop.f32.mrf.mxu0
    %v148 = vadd.f32 0.0, %v147
    %149 = vmatmul.f32.gmra.mxu0 %v122
    %v150 = vpop.f32.mrf.mxu0
    %v151 = vadd.f32 0.0, %v150
    %152 = vmatmul.f32.gmra.mxu0 %v125
    %v153 = vpop.f32.mrf.mxu0
    %v154 = vadd.f32 0.0, %v153
    %155 = vmatmul.f32.gmra.mxu0 %v128
    %v156 = vpop.f32.mrf.mxu0
    %v157 = vadd.f32 0.0, %v156
    %158 = vdwg.mxu0
    %v160 = vsel %vm88, %v84, 0
    %v163 = vsel %vm88, %v85, 0
    %v166 = vsel %vm88, %v86, 0
    %v169 = vsel %vm88, %v87, 0
    %171 = vmatpush.msra.mxu0 0.0
    %172 = vmatpush.msra.mxu0 0.0
    %173 = vmatpush.msra.mxu0 0.0
    %174 = vmatpush.msra.mxu0 0.0
    %175 = vmatpush.msra.mxu0 0.0
    %176 = vmatpush.msra.mxu0 0.0
    %177 = vmatpush.msra.mxu0 0.0
    %178 = vmatpush.msra.mxu0 0.0
    %179 = vmatpush.msra.mxu0 %v105
    %180 = vmatpush.msra.mxu0 %v104
    %181 = vmatpush.msra.mxu0 %v103
    %182 = vmatpush.msra.mxu0 %v102
    %183 = vmatpush.msra.mxu0 %v101
    %184 = vmatpush.msra.mxu0 %v100
    %185 = vmatpush.msra.mxu0 %v99
    %186 = vmatpush.msra.mxu0 %v98
    %187 = vmatmul.f32.gmra.mxu0 %v160
    %v188 = vpop.f32.mrf.mxu0
    %v189 = vadd.f32 %v148, %v188
    %190 = vmatmul.f32.gmra.mxu0 %v163
    %v191 = vpop.f32.mrf.mxu0
    %v192 = vadd.f32 %v151, %v191
    %193 = vmatmul.f32.gmra.mxu0 %v166
    %v194 = vpop.f32.mrf.mxu0
    %v195 = vadd.f32 %v154, %v194
    %196 = vmatmul.f32.gmra.mxu0 %v169
    %v197 = vpop.f32.mrf.mxu0
    %v198 = vadd.f32 %v157, %v197
    %199 = vdwg.mxu0
    %v200 = vld [vmem:[#allocation2 + $0x7] sm:$0xff]
    %v201 = vld [vmem:[#allocation2 + $0xf] sm:$0xff]
    %v202 = vld [vmem:[#allocation2 + $0x27] sm:$0xff]
    %v203 = vld [vmem:[#allocation2 + $0x2f] sm:$0xff]
    %s204 = scalar_lea.vmem %s1, 64
    %v205 = vld [vmem:[%s204] sm:$0xff]
    %v206 = vld [vmem:[%s204 + $0x8] sm:$0xff]
    %v207 = vld [vmem:[%s204 + $0x10] sm:$0xff]
    %v208 = vld [vmem:[%s204 + $0x18] sm:$0xff]
    %v209 = vld [vmem:[%s204 + $0x20] sm:$0xff]
    %v210 = vld [vmem:[%s204 + $0x28] sm:$0xff]
    %v211 = vld [vmem:[%s204 + $0x30] sm:$0xff]
    %v212 = vld [vmem:[%s204 + $0x38] sm:$0xff]
    %v214 = vsel %vm88, %v200, 0
    %v217 = vsel %vm88, %v201, 0
    %v220 = vsel %vm88, %v202, 0
    %v223 = vsel %vm88, %v203, 0
    %225 = vmatpush.msra.mxu0 0.0
    %226 = vmatpush.msra.mxu0 0.0
    %227 = vmatpush.msra.mxu0 0.0
    %228 = vmatpush.msra.mxu0 0.0
    %229 = vmatpush.msra.mxu0 0.0
    %230 = vmatpush.msra.mxu0 0.0
    %231 = vmatpush.msra.mxu0 0.0
    %232 = vmatpush.msra.mxu0 0.0
    %233 = vmatpush.msra.mxu0 %v212
    %234 = vmatpush.msra.mxu0 %v211
    %235 = vmatpush.msra.mxu0 %v210
    %236 = vmatpush.msra.mxu0 %v209
    %237 = vmatpush.msra.mxu0 %v208
    %238 = vmatpush.msra.mxu0 %v207
    %239 = vmatpush.msra.mxu0 %v206
    %240 = vmatpush.msra.mxu0 %v205
    %241 = vmatmul.f32.gmra.mxu0 %v214
    %v242 = vpop.f32.mrf.mxu0
    %v243 = vadd.f32 0.0, %v242
    %244 = vmatmul.f32.gmra.mxu0 %v217
    %v245 = vpop.f32.mrf.mxu0
    %v246 = vadd.f32 0.0, %v245
    %247 = vmatmul.f32.gmra.mxu0 %v220
    %v248 = vpop.f32.mrf.mxu0
    %v249 = vadd.f32 0.0, %v248
    %250 = vmatmul.f32.gmra.mxu0 %v223
    %v251 = vpop.f32.mrf.mxu0
    %v252 = vadd.f32 0.0, %v251
    %253 = vdwg.mxu0
    %v254 = vadd.f32 %v189, %v243
    %v255 = vadd.f32 %v192, %v246
    %v256 = vadd.f32 %v195, %v249
    %v257 = vadd.f32 %v198, %v252
    %v258 = vld [vmem:[#allocation2 + $0x9] sm:$0xff]
    %v259 = vld [vmem:[#allocation2 + $0x11] sm:$0xff]
    %v260 = vld [vmem:[#allocation2 + $0x29] sm:$0xff]
    %v261 = vld [vmem:[#allocation2 + $0x31] sm:$0xff]
    %s262 = scalar_lea.vmem %s1, 192
    %v263 = vld [vmem:[%s262] sm:$0xff]
    %v264 = vld [vmem:[%s262 + $0x8] sm:$0xff]
    %v265 = vld [vmem:[%s262 + $0x10] sm:$0xff]
    %v266 = vld [vmem:[%s262 + $0x18] sm:$0xff]
    %v267 = vld [vmem:[%s262 + $0x20] sm:$0xff]
    %v268 = vld [vmem:[%s262 + $0x28] sm:$0xff]
    %v269 = vld [vmem:[%s262 + $0x30] sm:$0xff]
    %v270 = vld [vmem:[%s262 + $0x38] sm:$0xff]
    %v272 = vsel %vm88, %v258, 0
    %v275 = vsel %vm88, %v259, 0
    %v278 = vsel %vm88, %v260, 0
    %v281 = vsel %vm88, %v261, 0
    %283 = vmatpush.msra.mxu0 0.0
    %284 = vmatpush.msra.mxu0 0.0
    %285 = vmatpush.msra.mxu0 0.0
    %286 = vmatpush.msra.mxu0 0.0
    %287 = vmatpush.msra.mxu0 0.0
    %288 = vmatpush.msra.mxu0 0.0
    %289 = vmatpush.msra.mxu0 0.0
    %290 = vmatpush.msra.mxu0 0.0
    %291 = vmatpush.msra.mxu0 %v270
    %292 = vmatpush.msra.mxu0 %v269
    %293 = vmatpush.msra.mxu0 %v268
    %294 = vmatpush.msra.mxu0 %v267
    %295 = vmatpush.msra.mxu0 %v266
    %296 = vmatpush.msra.mxu0 %v265
    %297 = vmatpush.msra.mxu0 %v264
    %298 = vmatpush.msra.mxu0 %v263
    %299 = vmatmul.f32.gmra.mxu0 %v272
    %v300 = vpop.f32.mrf.mxu0
    %v301 = vadd.f32 0.0, %v300
    %302 = vmatmul.f32.gmra.mxu0 %v275
    %v303 = vpop.f32.mrf.mxu0
    %v304 = vadd.f32 0.0, %v303
    %305 = vmatmul.f32.gmra.mxu0 %v278
    %v306 = vpop.f32.mrf.mxu0
    %v307 = vadd.f32 0.0, %v306
    %308 = vmatmul.f32.gmra.mxu0 %v281
    %v309 = vpop.f32.mrf.mxu0
    %v310 = vadd.f32 0.0, %v309
    %311 = vdwg.mxu0
    %v312 = vadd.f32 %v254, %v301
    %v313 = vadd.f32 %v255, %v304
    %v314 = vadd.f32 %v256, %v307
    %v315 = vadd.f32 %v257, %v310
    %v316 = vld [vmem:[#allocation2 + $0xa] sm:$0xff]
    %v317 = vld [vmem:[#allocation2 + $0x12] sm:$0xff]
    %v318 = vld [vmem:[#allocation2 + $0x2a] sm:$0xff]
    %v319 = vld [vmem:[#allocation2 + $0x32] sm:$0xff]
    %s320 = scalar_lea.vmem %s1, 256
    %v321 = vld [vmem:[%s320] sm:$0xff]
    %v322 = vld [vmem:[%s320 + $0x8] sm:$0xff]
    %v323 = vld [vmem:[%s320 + $0x10] sm:$0xff]
    %v324 = vld [vmem:[%s320 + $0x18] sm:$0xff]
    %v325 = vld [vmem:[%s320 + $0x20] sm:$0xff]
    %v326 = vld [vmem:[%s320 + $0x28] sm:$0xff]
    %v327 = vld [vmem:[%s320 + $0x30] sm:$0xff]
    %v328 = vld [vmem:[%s320 + $0x38] sm:$0xff]
    %v330 = vsel %vm88, %v316, 0
    %v333 = vsel %vm88, %v317, 0
    %v336 = vsel %vm88, %v318, 0
    %v339 = vsel %vm88, %v319, 0
    %341 = vmatpush.msra.mxu0 0.0
    %342 = vmatpush.msra.mxu0 0.0
    %343 = vmatpush.msra.mxu0 0.0
    %344 = vmatpush.msra.mxu0 0.0
    %345 = vmatpush.msra.mxu0 0.0
    %346 = vmatpush.msra.mxu0 0.0
    %347 = vmatpush.msra.mxu0 0.0
    %348 = vmatpush.msra.mxu0 0.0
    %349 = vmatpush.msra.mxu0 %v328
    %350 = vmatpush.msra.mxu0 %v327
    %351 = vmatpush.msra.mxu0 %v326
    %352 = vmatpush.msra.mxu0 %v325
    %353 = vmatpush.msra.mxu0 %v324
    %354 = vmatpush.msra.mxu0 %v323
    %355 = vmatpush.msra.mxu0 %v322
    %356 = vmatpush.msra.mxu0 %v321
    %357 = vmatmul.f32.gmra.mxu0 %v330
    %v358 = vpop.f32.mrf.mxu0
    %v359 = vadd.f32 0.0, %v358
    %360 = vmatmul.f32.gmra.mxu0 %v333
    %v361 = vpop.f32.mrf.mxu0
    %v362 = vadd.f32 0.0, %v361
    %363 = vmatmul.f32.gmra.mxu0 %v336
    %v364 = vpop.f32.mrf.mxu0
    %v365 = vadd.f32 0.0, %v364
    %366 = vmatmul.f32.gmra.mxu0 %v339
    %v367 = vpop.f32.mrf.mxu0
    %v368 = vadd.f32 0.0, %v367
    %369 = vdwg.mxu0
    %v370 = vadd.f32 %v312, %v359
    %v371 = vadd.f32 %v313, %v362
    %v372 = vadd.f32 %v314, %v365
    %v373 = vadd.f32 %v315, %v368
    %v374 = vld [vmem:[%s2] sm:$0xff]
    %v375 = vld [vmem:[%s2 + $0x8] sm:$0xff]
    %v376 = vld [vmem:[%s2 + $0x10] sm:$0xff]
    %v377 = vld [vmem:[%s2 + $0x18] sm:$0xff]
    %v378 = vld [vmem:[%s2 + $0x20] sm:$0xff]
    %v379 = vld [vmem:[%s2 + $0x28] sm:$0xff]
    %v380 = vld [vmem:[%s2 + $0x30] sm:$0xff]
    %v381 = vld [vmem:[%s2 + $0x38] sm:$0xff]
    %382 = vmatpush.msra.mxu0 0.0
    %383 = vmatpush.msra.mxu0 0.0
    %384 = vmatpush.msra.mxu0 0.0
    %385 = vmatpush.msra.mxu0 0.0
    %386 = vmatpush.msra.mxu0 0.0
    %387 = vmatpush.msra.mxu0 0.0
    %388 = vmatpush.msra.mxu0 0.0
    %389 = vmatpush.msra.mxu0 0.0
    %390 = vmatpush.msra.mxu0 %v381
    %391 = vmatpush.msra.mxu0 %v380
    %392 = vmatpush.msra.mxu0 %v379
    %393 = vmatpush.msra.mxu0 %v378
    %394 = vmatpush.msra.mxu0 %v377
    %395 = vmatpush.msra.mxu0 %v376
    %396 = vmatpush.msra.mxu0 %v375
    %397 = vmatpush.msra.mxu0 %v374
    %398 = vmatmul.f32.gmra.mxu0 %v160
    %v399 = vpop.f32.mrf.mxu0
    %v400 = vadd.f32 0.0, %v399
    %401 = vmatmul.f32.gmra.mxu0 %v163
    %v402 = vpop.f32.mrf.mxu0
    %v403 = vadd.f32 0.0, %v402
    %404 = vmatmul.f32.gmra.mxu0 %v166
    %v405 = vpop.f32.mrf.mxu0
    %v406 = vadd.f32 0.0, %v405
    %407 = vmatmul.f32.gmra.mxu0 %v169
    %v408 = vpop.f32.mrf.mxu0
    %v409 = vadd.f32 0.0, %v408
    %410 = vdwg.mxu0
    %v411 = vadd.f32 %v370, %v371
    %v412 = vadd.f32 %v411, %v372
    %v413 = vadd.f32 %v412, %v373
    %v414 = vrot.slane %v413, 4
    %v415 = vadd.f32 %v413, %v414
    %v416 = vrot.slane %v415, 2
    %v417 = vadd.f32 %v415, %v416
    %v418 = vrot.slane %v417, 1
    %v419 = vadd.f32 %v417, %v418
    %420 = vmatpush.msra.mxu0 %v79
    %421 = vmatpush.msra.mxu0 %v78
    %422 = vmatpush.msra.mxu0 %v77
    %423 = vmatpush.msra.mxu0 %v76
    %424 = vmatpush.msra.mxu0 %v75
    %425 = vmatpush.msra.mxu0 %v74
    %426 = vmatpush.msra.mxu0 %v73
    %427 = vmatpush.msra.mxu0 %v72
    %428 = vmatpush.msra.mxu0 %v71
    %429 = vmatpush.msra.mxu0 %v70
    %430 = vmatpush.msra.mxu0 %v69
    %431 = vmatpush.msra.mxu0 %v68
    %432 = vmatpush.msra.mxu0 %v67
    %433 = vmatpush.msra.mxu0 %v66
    %434 = vmatpush.msra.mxu0 %v65
    %435 = vmatpush.msra.mxu0 %v64
    %436 = vmatmul.f32.gmra.mxu0 %v419
    %v437 = vpop.f32.mrf.mxu0
    %v438 = vadd.f32 0.0, %v437
    %439 = vdwg.mxu0
    %v440 = vmul.f32 %v438, 0.001953125
    %v441 = vperm.slane %v440, 0
    %v442 = vsub.f32 %v370, %v441
    %v443 = vsub.f32 %v371, %v441
    %v444 = vsub.f32 %v372, %v441
    %v445 = vsub.f32 %v373, %v441
    %v446 = vmul.f32 %v442, %v442
    %v447 = vmul.f32 %v443, %v443
    %v448 = vmul.f32 %v444, %v444
    %v449 = vmul.f32 %v445, %v445
    %v450 = vadd.f32 %v446, %v447
    %v451 = vadd.f32 %v450, %v448
    %v452 = vadd.f32 %v451, %v449
    %v453 = vrot.slane %v452, 4
    %v454 = vadd.f32 %v452, %v453
    %v455 = vrot.slane %v454, 2
    %v456 = vadd.f32 %v454, %v455
    %v457 = vrot.slane %v456, 1
    %v458 = vadd.f32 %v456, %v457
    %459 = vmatpush.msra.mxu0 %v79
    %460 = vmatpush.msra.mxu0 %v78
    %461 = vmatpush.msra.mxu0 %v77
    %462 = vmatpush.msra.mxu0 %v76
    %463 = vmatpush.msra.mxu0 %v75
    %464 = vmatpush.msra.mxu0 %v74
    %465 = vmatpush.msra.mxu0 %v73
    %466 = vmatpush.msra.mxu0 %v72
    %467 = vmatpush.msra.mxu0 %v71
    %468 = vmatpush.msra.mxu0 %v70
    %469 = vmatpush.msra.mxu0 %v69
    %470 = vmatpush.msra.mxu0 %v68
    %471 = vmatpush.msra.mxu0 %v67
    %472 = vmatpush.msra.mxu0 %v66
    %473 = vmatpush.msra.mxu0 %v65
    %474 = vmatpush.msra.mxu0 %v64
    %475 = vmatmul.f32.gmra.mxu0 %v458
    %v476 = vpop.f32.mrf.mxu0
    %v477 = vadd.f32 0.0, %v476
    %478 = vdwg.mxu0
    %v479 = vmul.f32 %v477, 0.001953125
    %v480 = vadd.f32 %v479, 1e-05
    %v481 = vrsqrt.pop %v480
    %v482 = vmul.f32 %v481, %v480
    %v483 = vmul.f32 %v482, %v481
    %v484 = vmul.f32 0.5, %v483
    %v485 = vsub.f32 1.5, %v484
    %v486 = vmul.f32 %v481, %v485
    %vm487 = vweird.f32 %v480
    %vm488 = vweird.f32 %v481
    %vm489 = vmor %vm487, %vm488
    %v490 = vsel %vm489, %v481, %v486
    %v491 = vmul.f32 %v80, %v490
    %v493 = vperm.slane %v491, 0
    %v495 = vmul.f32 %v442, %v493
    %v496 = vmul.f32 %v443, %v493
    %v497 = vmul.f32 %v444, %v493
    %v498 = vmul.f32 %v445, %v493
    %v500 = vperm.slane %v81, 0
    %v502 = vadd.f32 %v495, %v500
    %v503 = vadd.f32 %v496, %v500
    %v504 = vadd.f32 %v497, %v500
    %v505 = vadd.f32 %v498, %v500
    %v506 = vmax.f32 %v502, 0.0
    %v507 = vmax.f32 %v503, 0.0
    %v508 = vmax.f32 %v504, 0.0
    %v509 = vmax.f32 %v505, 0.0
    %510 = vst [vmem:[#allocation3] sm:$0xff] 0.0
    %511 = vst [vmem:[#allocation3 + $0x20] sm:$0xff] 0.0
    %512 = vst [vmem:[#allocation3 + $0x18] sm:$0xff] 0.0
    %513 = vst [vmem:[#allocation3 + $0x38] sm:$0xff] 0.0
    %514 = vst [vmem:[#allocation3 + $0x8] sm:$0xff] %v506
    %515 = vst [vmem:[#allocation3 + $0x10] sm:$0xff] %v507
    %516 = vst [vmem:[#allocation3 + $0x28] sm:$0xff] %v508
    %517 = vst [vmem:[#allocation3 + $0x30] sm:$0xff] %v509
    %s518 = scalar_lea.vmem [#allocation4], 256
    %v519 = vld [vmem:[%s518] sm:$0xff]
    %v520 = vld [vmem:[%s518 + $0x8] sm:$0xff]
    %v521 = vld [vmem:[%s518 + $0x10] sm:$0xff]
    %v522 = vld [vmem:[%s518 + $0x18] sm:$0xff]
    %v523 = vld [vmem:[%s518 + $0x20] sm:$0xff]
    %v524 = vld [vmem:[%s518 + $0x28] sm:$0xff]
    %v525 = vld [vmem:[%s518 + $0x30] sm:$0xff]
    %v526 = vld [vmem:[%s518 + $0x38] sm:$0xff]
    %v527 = vld [vmem:[%s518 + $0x40] sm:$0xff]
    %v528 = vld [vmem:[%s518 + $0x48] sm:$0xff]
    %v529 = vld [vmem:[%s518 + $0x50] sm:$0xff]
    %v530 = vld [vmem:[%s518 + $0x58] sm:$0xff]
    %v531 = vld [vmem:[%s518 + $0x60] sm:$0xff]
    %v532 = vld [vmem:[%s518 + $0x68] sm:$0xff]
    %v533 = vld [vmem:[%s518 + $0x70] sm:$0xff]
    %v534 = vld [vmem:[%s518 + $0x78] sm:$0xff]
    %v535 = vld [vmem:[#allocation3 + $0x6] sm:$0xff]
    %v536 = vld [vmem:[#allocation3 + $0xe] sm:$0xff]
    %v537 = vld [vmem:[#allocation3 + $0x26] sm:$0xff]
    %v538 = vld [vmem:[#allocation3 + $0x2e] sm:$0xff]
    %v539 = vld [vmem:[#allocation4] sm:$0xff]
    %v540 = vld [vmem:[#allocation4 + $0x8] sm:$0xff]
    %v541 = vld [vmem:[#allocation4 + $0x10] sm:$0xff]
    %v542 = vld [vmem:[#allocation4 + $0x18] sm:$0xff]
    %v543 = vld [vmem:[#allocation4 + $0x20] sm:$0xff]
    %v544 = vld [vmem:[#allocation4 + $0x28] sm:$0xff]
    %v545 = vld [vmem:[#allocation4 + $0x30] sm:$0xff]
    %v546 = vld [vmem:[#allocation4 + $0x38] sm:$0xff]
    %v547 = vld [vmem:[#allocation4 + $0x40] sm:$0xff]
    %v548 = vld [vmem:[#allocation4 + $0x48] sm:$0xff]
    %v549 = vld [vmem:[#allocation4 + $0x50] sm:$0xff]
    %v550 = vld [vmem:[#allocation4 + $0x58] sm:$0xff]
    %v551 = vld [vmem:[#allocation4 + $0x60] sm:$0xff]
    %v552 = vld [vmem:[#allocation4 + $0x68] sm:$0xff]
    %v553 = vld [vmem:[#allocation4 + $0x70] sm:$0xff]
    %v554 = vld [vmem:[#allocation4 + $0x78] sm:$0xff]
    %555 = vmatpush.msra.mxu0 %v554
    %556 = vmatpush.msra.mxu0 %v553
    %557 = vmatpush.msra.mxu0 %v552
    %558 = vmatpush.msra.mxu0 %v551
    %559 = vmatpush.msra.mxu0 %v550
    %560 = vmatpush.msra.mxu0 %v549
    %561 = vmatpush.msra.mxu0 %v548
    %562 = vmatpush.msra.mxu0 %v547
    %563 = vmatpush.msra.mxu0 %v546
    %564 = vmatpush.msra.mxu0 %v545
    %565 = vmatpush.msra.mxu0 %v544
    %566 = vmatpush.msra.mxu0 %v543
    %567 = vmatpush.msra.mxu0 %v542
    %568 = vmatpush.msra.mxu0 %v541
    %569 = vmatpush.msra.mxu0 %v540
    %570 = vmatpush.msra.mxu0 %v539
    %571 = vmatmul.f32.gmra.mxu0 %v535
    %v572 = vpop.f32.mrf.mxu0
    %v573 = vadd.f32 0.0, %v572
    %574 = vmatmul.f32.gmra.mxu0 %v536
    %v575 = vpop.f32.mrf.mxu0
    %v576 = vadd.f32 0.0, %v575
    %577 = vmatmul.f32.gmra.mxu0 %v537
    %v578 = vpop.f32.mrf.mxu0
    %v579 = vadd.f32 0.0, %v578
    %580 = vmatmul.f32.gmra.mxu0 %v538
    %v581 = vpop.f32.mrf.mxu0
    %v582 = vadd.f32 0.0, %v581
    %583 = vdwg.mxu0
    %584 = vmatpush.msra.mxu0 %v534
    %585 = vmatpush.msra.mxu0 %v533
    %586 = vmatpush.msra.mxu0 %v532
    %587 = vmatpush.msra.mxu0 %v531
    %588 = vmatpush.msra.mxu0 %v530
    %589 = vmatpush.msra.mxu0 %v529
    %590 = vmatpush.msra.mxu0 %v528
    %591 = vmatpush.msra.mxu0 %v527
    %592 = vmatpush.msra.mxu0 %v526
    %593 = vmatpush.msra.mxu0 %v525
    %594 = vmatpush.msra.mxu0 %v524
    %595 = vmatpush.msra.mxu0 %v523
    %596 = vmatpush.msra.mxu0 %v522
    %597 = vmatpush.msra.mxu0 %v521
    %598 = vmatpush.msra.mxu0 %v520
    %599 = vmatpush.msra.mxu0 %v519
    %600 = vmatmul.f32.gmra.mxu0 %v506
    %v601 = vpop.f32.mrf.mxu0
    %v602 = vadd.f32 %v573, %v601
    %603 = vmatmul.f32.gmra.mxu0 %v507
    %v604 = vpop.f32.mrf.mxu0
    %v605 = vadd.f32 %v576, %v604
    %606 = vmatmul.f32.gmra.mxu0 %v508
    %v607 = vpop.f32.mrf.mxu0
    %v608 = vadd.f32 %v579, %v607
    %609 = vmatmul.f32.gmra.mxu0 %v509
    %v610 = vpop.f32.mrf.mxu0
    %v611 = vadd.f32 %v582, %v610
    %612 = vdwg.mxu0
    %v613 = vld [vmem:[#allocation3 + $0x7] sm:$0xff]
    %v614 = vld [vmem:[#allocation3 + $0xf] sm:$0xff]
    %v615 = vld [vmem:[#allocation3 + $0x27] sm:$0xff]
    %v616 = vld [vmem:[#allocation3 + $0x2f] sm:$0xff]
    %s617 = scalar_lea.vmem [#allocation4], 128
    %v618 = vld [vmem:[%s617] sm:$0xff]
    %v619 = vld [vmem:[%s617 + $0x8] sm:$0xff]
    %v620 = vld [vmem:[%s617 + $0x10] sm:$0xff]
    %v621 = vld [vmem:[%s617 + $0x18] sm:$0xff]
    %v622 = vld [vmem:[%s617 + $0x20] sm:$0xff]
    %v623 = vld [vmem:[%s617 + $0x28] sm:$0xff]
    %v624 = vld [vmem:[%s617 + $0x30] sm:$0xff]
    %v625 = vld [vmem:[%s617 + $0x38] sm:$0xff]
    %v626 = vld [vmem:[%s617 + $0x40] sm:$0xff]
    %v627 = vld [vmem:[%s617 + $0x48] sm:$0xff]
    %v628 = vld [vmem:[%s617 + $0x50] sm:$0xff]
    %v629 = vld [vmem:[%s617 + $0x58] sm:$0xff]
    %v630 = vld [vmem:[%s617 + $0x60] sm:$0xff]
    %v631 = vld [vmem:[%s617 + $0x68] sm:$0xff]
    %v632 = vld [vmem:[%s617 + $0x70] sm:$0xff]
    %v633 = vld [vmem:[%s617 + $0x78] sm:$0xff]
    %634 = vmatpush.msra.mxu0 %v633
    %635 = vmatpush.msra.mxu0 %v632
    %636 = vmatpush.msra.mxu0 %v631
    %637 = vmatpush.msra.mxu0 %v630
    %638 = vmatpush.msra.mxu0 %v629
    %639 = vmatpush.msra.mxu0 %v628
    %640 = vmatpush.msra.mxu0 %v627
    %641 = vmatpush.msra.mxu0 %v626
    %642 = vmatpush.msra.mxu0 %v625
    %643 = vmatpush.msra.mxu0 %v624
    %644 = vmatpush.msra.mxu0 %v623
    %645 = vmatpush.msra.mxu0 %v622
    %646 = vmatpush.msra.mxu0 %v621
    %647 = vmatpush.msra.mxu0 %v620
    %648 = vmatpush.msra.mxu0 %v619
    %649 = vmatpush.msra.mxu0 %v618
    %650 = vmatmul.f32.gmra.mxu0 %v613
    %v651 = vpop.f32.mrf.mxu0
    %v652 = vadd.f32 0.0, %v651
    %653 = vmatmul.f32.gmra.mxu0 %v614
    %v654 = vpop.f32.mrf.mxu0
    %v655 = vadd.f32 0.0, %v654
    %656 = vmatmul.f32.gmra.mxu0 %v615
    %v657 = vpop.f32.mrf.mxu0
    %v658 = vadd.f32 0.0, %v657
    %659 = vmatmul.f32.gmra.mxu0 %v616
    %v660 = vpop.f32.mrf.mxu0
    %v661 = vadd.f32 0.0, %v660
    %662 = vdwg.mxu0
    %v663 = vadd.f32 %v602, %v652
    %v664 = vadd.f32 %v605, %v655
    %v665 = vadd.f32 %v608, %v658
    %v666 = vadd.f32 %v611, %v661
    %v667 = vld [vmem:[#allocation3 + $0x9] sm:$0xff]
    %v668 = vld [vmem:[#allocation3 + $0x11] sm:$0xff]
    %v669 = vld [vmem:[#allocation3 + $0x29] sm:$0xff]
    %v670 = vld [vmem:[#allocation3 + $0x31] sm:$0xff]
    %s671 = scalar_lea.vmem [#allocation4], 384
    %v672 = vld [vmem:[%s671] sm:$0xff]
    %v673 = vld [vmem:[%s671 + $0x8] sm:$0xff]
    %v674 = vld [vmem:[%s671 + $0x10] sm:$0xff]
    %v675 = vld [vmem:[%s671 + $0x18] sm:$0xff]
    %v676 = vld [vmem:[%s671 + $0x20] sm:$0xff]
    %v677 = vld [vmem:[%s671 + $0x28] sm:$0xff]
    %v678 = vld [vmem:[%s671 + $0x30] sm:$0xff]
    %v679 = vld [vmem:[%s671 + $0x38] sm:$0xff]
    %v680 = vld [vmem:[%s671 + $0x40] sm:$0xff]
    %v681 = vld [vmem:[%s671 + $0x48] sm:$0xff]
    %v682 = vld [vmem:[%s671 + $0x50] sm:$0xff]
    %v683 = vld [vmem:[%s671 + $0x58] sm:$0xff]
    %v684 = vld [vmem:[%s671 + $0x60] sm:$0xff]
    %v685 = vld [vmem:[%s671 + $0x68] sm:$0xff]
    %v686 = vld [vmem:[%s671 + $0x70] sm:$0xff]
    %v687 = vld [vmem:[%s671 + $0x78] sm:$0xff]
    %688 = vmatpush.msra.mxu0 %v687
    %689 = vmatpush.msra.mxu0 %v686
    %690 = vmatpush.msra.mxu0 %v685
    %691 = vmatpush.msra.mxu0 %v684
    %692 = vmatpush.msra.mxu0 %v683
    %693 = vmatpush.msra.mxu0 %v682
    %694 = vmatpush.msra.mxu0 %v681
    %695 = vmatpush.msra.mxu0 %v680
    %696 = vmatpush.msra.mxu0 %v679
    %697 = vmatpush.msra.mxu0 %v678
    %698 = vmatpush.msra.mxu0 %v677
    %699 = vmatpush.msra.mxu0 %v676
    %700 = vmatpush.msra.mxu0 %v675
    %701 = vmatpush.msra.mxu0 %v674
    %702 = vmatpush.msra.mxu0 %v673
    %703 = vmatpush.msra.mxu0 %v672
    %704 = vmatmul.f32.gmra.mxu0 %v667
    %v705 = vpop.f32.mrf.mxu0
    %v706 = vadd.f32 0.0, %v705
    %707 = vmatmul.f32.gmra.mxu0 %v668
    %v708 = vpop.f32.mrf.mxu0
    %v709 = vadd.f32 0.0, %v708
    %710 = vmatmul.f32.gmra.mxu0 %v669
    %v711 = vpop.f32.mrf.mxu0
    %v712 = vadd.f32 0.0, %v711
    %713 = vmatmul.f32.gmra.mxu0 %v670
    %v714 = vpop.f32.mrf.mxu0
    %v715 = vadd.f32 0.0, %v714
    %716 = vdwg.mxu0
    %v717 = vadd.f32 %v663, %v706
    %v718 = vadd.f32 %v664, %v709
    %v719 = vadd.f32 %v665, %v712
    %v720 = vadd.f32 %v666, %v715
    %v721 = vld [vmem:[#allocation3 + $0xa] sm:$0xff]
    %v722 = vld [vmem:[#allocation3 + $0x12] sm:$0xff]
    %v723 = vld [vmem:[#allocation3 + $0x2a] sm:$0xff]
    %v724 = vld [vmem:[#allocation3 + $0x32] sm:$0xff]
    %s725 = scalar_lea.vmem [#allocation4], 512
    %v726 = vld [vmem:[%s725] sm:$0xff]
    %v727 = vld [vmem:[%s725 + $0x8] sm:$0xff]
    %v728 = vld [vmem:[%s725 + $0x10] sm:$0xff]
    %v729 = vld [vmem:[%s725 + $0x18] sm:$0xff]
    %v730 = vld [vmem:[%s725 + $0x20] sm:$0xff]
    %v731 = vld [vmem:[%s725 + $0x28] sm:$0xff]
    %v732 = vld [vmem:[%s725 + $0x30] sm:$0xff]
    %v733 = vld [vmem:[%s725 + $0x38] sm:$0xff]
    %v734 = vld [vmem:[%s725 + $0x40] sm:$0xff]
    %v735 = vld [vmem:[%s725 + $0x48] sm:$0xff]
    %v736 = vld [vmem:[%s725 + $0x50] sm:$0xff]
    %v737 = vld [vmem:[%s725 + $0x58] sm:$0xff]
    %v738 = vld [vmem:[%s725 + $0x60] sm:$0xff]
    %v739 = vld [vmem:[%s725 + $0x68] sm:$0xff]
    %v740 = vld [vmem:[%s725 + $0x70] sm:$0xff]
    %v741 = vld [vmem:[%s725 + $0x78] sm:$0xff]
    %742 = vmatpush.msra.mxu0 %v741
    %743 = vmatpush.msra.mxu0 %v740
    %744 = vmatpush.msra.mxu0 %v739
    %745 = vmatpush.msra.mxu0 %v738
    %746 = vmatpush.msra.mxu0 %v737
    %747 = vmatpush.msra.mxu0 %v736
    %748 = vmatpush.msra.mxu0 %v735
    %749 = vmatpush.msra.mxu0 %v734
    %750 = vmatpush.msra.mxu0 %v733
    %751 = vmatpush.msra.mxu0 %v732
    %752 = vmatpush.msra.mxu0 %v731
    %753 = vmatpush.msra.mxu0 %v730
    %754 = vmatpush.msra.mxu0 %v729
    %755 = vmatpush.msra.mxu0 %v728
    %756 = vmatpush.msra.mxu0 %v727
    %757 = vmatpush.msra.mxu0 %v726
    %758 = vmatmul.f32.gmra.mxu0 %v721
    %v759 = vpop.f32.mrf.mxu0
    %v760 = vadd.f32 0.0, %v759
    %761 = vmatmul.f32.gmra.mxu0 %v722
    %v762 = vpop.f32.mrf.mxu0
    %v763 = vadd.f32 0.0, %v762
    %764 = vmatmul.f32.gmra.mxu0 %v723
    %v765 = vpop.f32.mrf.mxu0
    %v766 = vadd.f32 0.0, %v765
    %767 = vmatmul.f32.gmra.mxu0 %v724
    %v768 = vpop.f32.mrf.mxu0
    %v769 = vadd.f32 0.0, %v768
    %770 = vdwg.mxu0
    %v771 = vadd.f32 %v717, %v760
    %v772 = vadd.f32 %v718, %v763
    %v773 = vadd.f32 %v719, %v766
    %v774 = vadd.f32 %v720, %v769
    %v775 = vadd.f32 %v771, %v772
    %v776 = vadd.f32 %v775, %v773
    %v777 = vadd.f32 %v776, %v774
    %v778 = vrot.slane %v777, 4
    %v779 = vadd.f32 %v777, %v778
    %v780 = vrot.slane %v779, 2
    %v781 = vadd.f32 %v779, %v780
    %v782 = vrot.slane %v781, 1
    %v783 = vadd.f32 %v781, %v782
    %784 = vmatpush.msra.mxu0 %v79
    %785 = vmatpush.msra.mxu0 %v78
    %786 = vmatpush.msra.mxu0 %v77
    %787 = vmatpush.msra.mxu0 %v76
    %788 = vmatpush.msra.mxu0 %v75
    %789 = vmatpush.msra.mxu0 %v74
    %790 = vmatpush.msra.mxu0 %v73
    %791 = vmatpush.msra.mxu0 %v72
    %792 = vmatpush.msra.mxu0 %v71
    %793 = vmatpush.msra.mxu0 %v70
    %794 = vmatpush.msra.mxu0 %v69
    %795 = vmatpush.msra.mxu0 %v68
    %796 = vmatpush.msra.mxu0 %v67
    %797 = vmatpush.msra.mxu0 %v66
    %798 = vmatpush.msra.mxu0 %v65
    %799 = vmatpush.msra.mxu0 %v64
    %800 = vmatmul.f32.gmra.mxu0 %v783
    %v801 = vpop.f32.mrf.mxu0
    %v802 = vadd.f32 0.0, %v801
    %803 = vdwg.mxu0
    %v804 = vmul.f32 %v802, 0.001953125
    %v805 = vperm.slane %v804, 0
    %v806 = vsub.f32 %v771, %v805
    %v807 = vsub.f32 %v772, %v805
    %v808 = vsub.f32 %v773, %v805
    %v809 = vsub.f32 %v774, %v805
    %v810 = vmul.f32 %v806, %v806
    %v811 = vmul.f32 %v807, %v807
    %v812 = vmul.f32 %v808, %v808
    %v813 = vmul.f32 %v809, %v809
    %v814 = vadd.f32 %v810, %v811
    %v815 = vadd.f32 %v814, %v812
    %v816 = vadd.f32 %v815, %v813
    %v817 = vrot.slane %v816, 4
    %v818 = vadd.f32 %v816, %v817
    %v819 = vrot.slane %v818, 2
    %v820 = vadd.f32 %v818, %v819
    %v821 = vrot.slane %v820, 1
    %v822 = vadd.f32 %v820, %v821
    %823 = vmatpush.msra.mxu0 %v79
    %824 = vmatpush.msra.mxu0 %v78
    %825 = vmatpush.msra.mxu0 %v77
    %826 = vmatpush.msra.mxu0 %v76
    %827 = vmatpush.msra.mxu0 %v75
    %828 = vmatpush.msra.mxu0 %v74
    %829 = vmatpush.msra.mxu0 %v73
    %830 = vmatpush.msra.mxu0 %v72
    %831 = vmatpush.msra.mxu0 %v71
    %832 = vmatpush.msra.mxu0 %v70
    %833 = vmatpush.msra.mxu0 %v69
    %834 = vmatpush.msra.mxu0 %v68
    %835 = vmatpush.msra.mxu0 %v67
    %836 = vmatpush.msra.mxu0 %v66
    %837 = vmatpush.msra.mxu0 %v65
    %838 = vmatpush.msra.mxu0 %v64
    %839 = vmatmul.f32.gmra.mxu0 %v822
    %v840 = vpop.f32.mrf.mxu0
    %v841 = vadd.f32 0.0, %v840
    %842 = vdwg.mxu0
    %v843 = vmul.f32 %v841, 0.001953125
    %v844 = vadd.f32 %v843, 1e-05
    %v845 = vrsqrt.pop %v844
    %v846 = vmul.f32 %v845, %v844
    %v847 = vmul.f32 %v846, %v845
    %v848 = vmul.f32 0.5, %v847
    %v849 = vsub.f32 1.5, %v848
    %v850 = vmul.f32 %v845, %v849
    %vm851 = vweird.f32 %v844
    %vm852 = vweird.f32 %v845
    %vm853 = vmor %vm851, %vm852
    %v854 = vsel %vm853, %v845, %v850
    %v855 = vmul.f32 %v82, %v854
    %v857 = vperm.slane %v855, 0
    %v859 = vmul.f32 %v806, %v857
    %v860 = vmul.f32 %v807, %v857
    %v861 = vmul.f32 %v808, %v857
    %v862 = vmul.f32 %v809, %v857
    %v864 = vperm.slane %v83, 0
    %v866 = vadd.f32 %v859, %v864
    %v867 = vadd.f32 %v860, %v864
    %v868 = vadd.f32 %v861, %v864
    %v869 = vadd.f32 %v862, %v864
    %v870 = vadd.f32 %v866, %v400
    %v871 = vadd.f32 %v867, %v403
    %v872 = vadd.f32 %v868, %v406
    %v873 = vadd.f32 %v869, %v409
    %v874 = vmax.f32 %v870, 0.0
    %v875 = vmax.f32 %v871, 0.0
    %v876 = vmax.f32 %v872, 0.0
    %v877 = vmax.f32 %v873, 0.0
    %878 = vst [vmem:[%s9] sm:$0xff] %v874
    %879 = vst [vmem:[%s9 + $0x8] sm:$0xff] %v875
    %880 = vst [vmem:[%s9 + $0x10] sm:$0xff] %v876
    %881 = vst [vmem:[%s9 + $0x18] sm:$0xff] %v877
    // Predicated region
    $region46: #{basic_block_2d.1} parent=1 // pred_check
      _
    $region47: #{basic_block_2d.1} parent=1 // pred_check_branch
      %883 = sbr.rel (0) target = $region49
    $region48: #{basic_block_2d.1} parent=1 // pred_region
      _
    $region49: #{basic_block_2d.1} parent=1 // pred_fallthru
      _
    // Predicated region
    $region50: #{basic_block_2d.1} parent=1 // pred_check
      _
    $region51: #{basic_block_2d.1} parent=1 // pred_check_branch
      %885 = sbr.rel (0) target = $region53
    $region52: #{basic_block_2d.1} parent=1 // pred_region
      _
    $region53: #{basic_block_2d.1} parent=1 // pred_fallthru
      _
    %886 = vsyncpa [#allocation5], 1
    %887 = vsyncpa [#allocation7], 1

</llo_original>
